<compile_context>
chip_gen: v6e
topology: v6e:2x2x1
jax: 0.10.0
libtpu: 0.0.40
codegen_flags: <defaults>
</compile_context>

<pallas_src>
import functools
import math

import numpy as np
import jax
import jax.numpy as jnp
from jax.experimental import pallas as pl
from jax.experimental.pallas import tpu as pltpu


# ----------------------------------------------------------------------------
# Hardware-aware budgets
# ----------------------------------------------------------------------------
def _physical_vmem_bytes():
    try:
        info = pltpu.get_tpu_info()
        return int(getattr(info, "vmem_capacity_bytes", 64 * 1024 * 1024))
    except Exception:
        return 64 * 1024 * 1024  # conservative (v7x per-TC VMEM)


def _round_up(x, m):
    return ((x + m - 1) // m) * m


# ----------------------------------------------------------------------------
# Pallas kernel: rotation-mixing matmul, tiled over N = Cout*Cin, bf16 output
# ----------------------------------------------------------------------------
def _rotate_mm_kernel(rot_ref, w_ref, o_ref):
    # [B*9, n*9] @ [n*9, tn] -> [B*9, tn]; f32 accumulation, bf16 store.
    o_ref[...] = jnp.dot(
        rot_ref[...], w_ref[...], preferred_element_type=jnp.float32
    ).astype(o_ref.dtype)


def pallas_rotate_mm(rot2d, w_flat, tile_n=4096):
    M, K = rot2d.shape
    K2, N = w_flat.shape
    assert K == K2
    tn = min(tile_n, N)
    grid = (pl.cdiv(N, tn),)
    return pl.pallas_call(
        _rotate_mm_kernel,
        out_shape=jax.ShapeDtypeStruct((M, N), jnp.bfloat16),
        grid=grid,
        in_specs=[
            pl.BlockSpec((M, K), lambda i: (0, 0)),   # small rot matrix, resident
            pl.BlockSpec((K, tn), lambda i: (0, i)),  # weight tiles stream
        ],
        out_specs=pl.BlockSpec((M, tn), lambda i: (0, i)),
        compiler_params=pltpu.CompilerParams(
            dimension_semantics=("parallel",),
        ),
    )(rot2d, w_flat)


# ----------------------------------------------------------------------------
# Pallas kernel: per-sample 3x3 conv as a sum of 9 shifted GEMMs (fused im2col)
# ----------------------------------------------------------------------------
def _arc_conv_kernel(w_ref, x_ref, o_ref, *, Wpad):
    # w_ref: (9, tile_co, tile_ci) bf16   mixed weights, tap-major
    # x_ref: (tile_ci, L_x) bf16          padded activation window, L_x = tile_l + 3*Wpad
    # o_ref: (tile_co, tile_l) f32        resident (same block) across the ci axis
    ci = pl.program_id(3)
    tile_l = o_ref.shape[1]

    acc = None
    if Wpad % 128 == 0:
        # Lane-aligned row stride: one unaligned lane shift per kw column tap;
        # the 3 kh row taps are then lane-aligned static slices (addressing only).
        L_big = tile_l + 2 * Wpad
        for kw in range(3):
            x_kw = x_ref[:, pl.ds(kw, L_big)]
            for kh in range(3):
                x_tap = x_kw[:, kh * Wpad: kh * Wpad + tile_l]
                d = jnp.dot(w_ref[kh * 3 + kw], x_tap,
                            preferred_element_type=jnp.float32)
                acc = d if acc is None else acc + d
    else:
        for kh in range(3):
            for kw in range(3):
                x_tap = x_ref[:, pl.ds(kh * Wpad + kw, tile_l)]
                d = jnp.dot(w_ref[kh * 3 + kw], x_tap,
                            preferred_element_type=jnp.float32)
                acc = d if acc is None else acc + d

    @pl.when(ci == 0)
    def _():
        o_ref[...] = acc

    @pl.when(ci > 0)
    def _():
        o_ref[...] = o_ref[...] + acc


# ----------------------------------------------------------------------------
# Tiling plans
# ----------------------------------------------------------------------------
def _pick_channel_tile(C):
    """Return (padded_C, tile): single full tile up to 256, else multiples of 128."""
    if C <= 256:
        return C, C
    if C % 256 == 0:
        return C, 256
    return _round_up(C, 128), 128


def _plan_spatial_tile(H, Wpad, tile_co, tile_ci, n_parallel, budget_bytes):
    """Pick rows-per-tile th so th*Wpad is a multiple of 128 (lane-dense stores)
    and the per-step VMEM residency fits the budget."""
    step_h = 128 // math.gcd(Wpad, 128)
    cands = sorted({t for t in range(step_h, H + 1, step_h) if H % t == 0} | {H})

    def residency(th):
        L_x = (th + 3) * Wpad
        tl = th * Wpad
        return (2 * tile_ci * L_x * 2           # x window (bf16, double-buffered)
                + 2 * 9 * tile_co * tile_ci * 2  # weights  (bf16, double-buffered)
                + 2 * tile_co * tl * 4)          # f32 output tile (double-buffered)

    th = cands[0]
    for t in reversed(cands):
        if residency(t) <= budget_bytes:
            th = t
            break
    # v7x megacore: make sure at least 2 "parallel" grid tiles exist.
    if n_parallel * (H // th) < 2:
        halves = [t for t in cands if t <= th // 2]
        if halves:
            th = max(halves)
    return th


def _choose_wpad(H, W):
    """Padded row width.  Prefer a lane-aligned (mult-of-128) row stride when the
    extra width padding is modest; otherwise make H*Wpad a multiple of 128 so
    output stores are lane-dense; else minimal padding."""
    base = W + 2
    lane = _round_up(base, 128)
    if lane <= int(1.25 * base):
        return lane
    step = 128 // math.gcd(H, 128)
    cand = _round_up(base, step)
    return cand if cand <= 2 * base else base


# ----------------------------------------------------------------------------
# Conv pallas_call wrapper
# ----------------------------------------------------------------------------
def pallas_arc_conv(w_g, x_win, *, Wpad, tile_co, tile_ci, vmem_limit_bytes):
    """w_g: [B, 9, Cout_p, Cin_p] bf16; x_win: [B, n_l, Cin_p, (th+3)*Wpad] bf16."""
    B, nine, Cout_p, Cin_p = w_g.shape
    assert nine == 9
    _, n_l, Cin2, L_x = x_win.shape
    assert Cin2 == Cin_p
    th = L_x // Wpad - 3
    tile_l = th * Wpad
    assert tile_l + 3 * Wpad == L_x
    L_out = n_l * tile_l
    assert Cout_p % tile_co == 0 and Cin_p % tile_ci == 0
    n_co = Cout_p // tile_co
    n_ci = Cin_p // tile_ci

    kernel = functools.partial(_arc_conv_kernel, Wpad=Wpad)

    flops = 2 * B * Cout_p * 9 * Cin_p * L_out
    bytes_accessed = (
        2 * B * n_co * n_l * Cin_p * L_x      # bf16 activation windows (re-streamed per co tile)
        + 2 * B * n_l * 9 * Cout_p * Cin_p    # bf16 mixed weights (re-streamed per l tile)
        + 4 * B * Cout_p * L_out              # f32 output writeback
    )

    return pl.pallas_call(
        kernel,
        out_shape=jax.ShapeDtypeStruct((B, Cout_p, L_out), jnp.float32),
        grid=(B, n_l, n_co, n_ci),
        in_specs=[
            pl.BlockSpec((None, 9, tile_co, tile_ci),
                         lambda b, l, co, ci: (b, 0, co, ci)),
            pl.BlockSpec((None, None, tile_ci, L_x),
                         lambda b, l, co, ci: (b, l, ci, 0)),
        ],
        out_specs=pl.BlockSpec((None, tile_co, tile_l),
                               lambda b, l, co, ci: (b, co, l)),
        compiler_params=pltpu.CompilerParams(
            dimension_semantics=("parallel", "parallel", "parallel", "arbitrary"),
            vmem_limit_bytes=int(vmem_limit_bytes),
        ),
        cost_estimate=pl.CostEstimate(
            flops=flops, transcendentals=0, bytes_accessed=bytes_accessed
        ),
    )(w_g, x_win)


# ----------------------------------------------------------------------------
# Rotation-matrix construction (faithful port of _get_rotation_matrix) — glue.
# ----------------------------------------------------------------------------
def get_rotation_matrix(thetas):
    bs, g = thetas.shape
    t = thetas.reshape(-1)
    x = jnp.cos(t)
    y = jnp.sin(t)
    a = x - y
    b = x * y
    c = x + y
    z = jnp.zeros_like(x)
    one = jnp.ones_like(x)

    rp = [
        [a, 1 - a, z, z, z, z, z, z, z],
        [z, x - b, b, z, 1 - c + b, y - b, z, z, z],
        [z, z, a, z, z, 1 - a, z, z, z],
        [b, y - b, z, x - b, 1 - c + b, z, z, z, z],
        [z, z, z, z, one, z, z, z, z],
        [z, z, z, z, 1 - c + b, x - b, z, y - b, b],
        [z, z, z, 1 - a, z, z, a, z, z],
        [z, z, z, y - b, 1 - c + b, z, b, x - b, z],
        [z, z, z, z, z, z, z, 1 - a, a],
    ]
    rn = [
        [c, z, z, 1 - c, z, z, z, z, z],
        [-b, x + b, z, b - y, 1 - a - b, z, z, z, z],
        [z, 1 - c, c, z, z, z, z, z, z],
        [z, z, z, x + b, 1 - a - b, z, -b, b - y, z],
        [z, z, z, z, one, z, z, z, z],
        [z, b - y, -b, z, 1 - a - b, x + b, z, z, z],
        [z, z, z, z, z, z, c, 1 - c, z],
        [z, z, z, z, 1 - a - b, b - y, z, x + b, -b],
        [z, z, z, z, z, 1 - c, z, z, c],
    ]
    pos = jnp.stack([jnp.stack(r, axis=0) for r in rp], axis=0)  # [9, 9, bs*g]
    neg = jnp.stack([jnp.stack(r, axis=0) for r in rn], axis=0)  # [9, 9, bs*g]
    mask = (t >= 0).astype(jnp.float32)[None, None, :]
    rot = mask * pos + (1.0 - mask) * neg                        # [9, 9, bs*g]
    rot = jnp.transpose(rot, (2, 0, 1)).reshape(bs, g, 9, 9)
    return rot


# ----------------------------------------------------------------------------
# batch_rotate_multiweight: mixing matmul in Pallas, reshapes as glue.
# ----------------------------------------------------------------------------
def rotate_weights_pallas(weights, lambdas, thetas):
    n, Cout, Cin, k, _ = weights.shape
    assert k == 3
    b = thetas.shape[0]
    rot = get_rotation_matrix(thetas) * lambdas[:, :, None, None]   # [b, n, 9, 9]
    rot2d = jnp.transpose(rot, (0, 2, 1, 3)).reshape(b * 9, n * 9)
    w_flat = jnp.transpose(weights, (0, 3, 4, 1, 2)).reshape(n * 9, Cout * Cin)
    mixed = pallas_rotate_mm(rot2d, w_flat)                         # [b*9, Cout*Cin] bf16
    # rows are (b, tap = kh*3+kw), cols are (Cout, Cin): plain reshape gives the
    # tap-major layout the conv kernel consumes directly.
    return mixed.reshape(b, 9, Cout, Cin)


# ----------------------------------------------------------------------------
# Forward pass of AdaptiveRotatedConv2d (stride=1, padding=1, dilation=1,
# groups=1, bias=False), with a synthetic routing function.
# ----------------------------------------------------------------------------
def adaptive_rotated_conv_forward(x, weight, w_alpha, w_theta):
    B, Cin, H, W = x.shape
    n, Cout = weight.shape[0], weight.shape[1]

    # TODO(synk): the PyTorch module takes `rounting_func` as an injected module;
    # a synthetic deterministic router (GAP -> linear heads) is used here.
    pooled = jnp.mean(x, axis=(2, 3))                     # [B, Cin]
    alphas = jax.nn.softmax(pooled @ w_alpha, axis=-1)    # [B, n]
    angles = jnp.tanh(pooled @ w_theta) * math.pi         # [B, n]

    # --- channel padding so reduction / output tiles are never ragged ---------
    Cout_p, tile_co = _pick_channel_tile(Cout)
    Cin_p, tile_ci = _pick_channel_tile(Cin)
    w_p = weight
    if Cout_p != Cout or Cin_p != Cin:
        w_p = jnp.pad(weight, ((0, 0), (0, Cout_p - Cout), (0, Cin_p - Cin),
                               (0, 0), (0, 0)))

    # rotate/mix kernels (Pallas, tiled over Cout*Cin), emitted as bf16
    w_g = rotate_weights_pallas(w_p, alphas, angles)      # [B, 9, Cout_p, Cin_p] bf16

    # --- activation: bf16, zero-padded once, flattened ("padded width" trick) --
    Wpad = _choose_wpad(H, W)
    x_bf = x.astype(jnp.bfloat16)
    if Cin_p != Cin:
        x_bf = jnp.pad(x_bf, ((0, 0), (0, Cin_p - Cin), (0, 0), (0, 0)))
    x_pad = jnp.pad(x_bf, ((0, 0), (0, 0), (1, 2), (1, Wpad - W - 1)))
    x_flat = x_pad.reshape(B, Cin_p, (H + 3) * Wpad)

    # --- VMEM budget / spatial tiling (v7x: 64 MiB physical, v5e/v6e: 128 MiB) -
    phys = _physical_vmem_bytes()
    vmem_limit = min(int(phys * 0.85), 100 * 1024 * 1024)
    budget = int(vmem_limit * 0.8)   # headroom for compiler scratch / pipelining
    th = _plan_spatial_tile(H, Wpad, tile_co, tile_ci,
                            n_parallel=B * (Cout_p // tile_co),
                            budget_bytes=budget)
    n_l = H // th
    L_x = (th + 3) * Wpad
    if n_l == 1:
        x_win = x_flat[:, None, :, :]                            # (B, 1, Cin_p, L_x)
    else:
        # Overlapping row-windows (halo = 3*Wpad) so each L-tile is self-contained.
        starts = jnp.arange(n_l) * (th * Wpad)
        idx = starts[:, None] + jnp.arange(L_x)[None, :]
        x_win = jnp.transpose(x_flat[:, :, idx], (0, 2, 1, 3))   # (B, n_l, Cin_p, L_x)

    out_flat = pallas_arc_conv(w_g, x_win, Wpad=Wpad, tile_co=tile_co,
                               tile_ci=tile_ci, vmem_limit_bytes=vmem_limit)
    # crop padded channels and garbage width columns
    out = out_flat.reshape(B, Cout_p, H, Wpad)[:, :Cout, :, :W]
    return out, (alphas, angles)


# ----------------------------------------------------------------------------
# Pure-JAX reference (mirrors batch_rotate_multiweight + F.conv2d exactly),
# computed at HIGHEST precision (true f32) to validate the bf16-MXU kernel.
# ----------------------------------------------------------------------------
def reference_forward(x, weight, alphas, angles):
    B, Cin, H, W = x.shape
    n, Cout = weight.shape[0], weight.shape[1]
    rot = get_rotation_matrix(angles) * alphas[:, :, None, None]
    rot2d = jnp.transpose(rot, (0, 2, 1, 3)).reshape(B * 9, n * 9)
    w_flat = jnp.transpose(weight, (0, 3, 4, 1, 2)).reshape(n * 9, Cout * Cin)
    mixed = jnp.dot(rot2d, w_flat, precision=jax.lax.Precision.HIGHEST)
    w_rot = jnp.transpose(
        mixed.reshape(B, 3, 3, Cout, Cin), (0, 3, 4, 1, 2)
    ).reshape(B * Cout, Cin, 3, 3)
    x_r = x.reshape(1, B * Cin, H, W)
    out = jax.lax.conv_general_dilated(
        x_r, w_rot,
        window_strides=(1, 1), padding=((1, 1), (1, 1)),
        dimension_numbers=("NCHW", "OIHW", "NCHW"),
        feature_group_count=B,
        precision=jax.lax.Precision.HIGHEST,
    )
    return out.reshape(B, Cout, H, W)


if __name__ == "__main__":
    B, Cin, H, W = 2, 4, 16, 16
    Cout, n, k = 8, 4, 3

    key = jax.random.PRNGKey(0)
    k_w, k_x, k_a, k_t = jax.random.split(key, 4)

    # kaiming_normal_(mode='fan_out', nonlinearity='relu') on
    # [kernel_number, Cout, Cin, k, k]: fan_out = size(0) * Cin * k * k
    std = math.sqrt(2.0 / (n * Cin * k * k))
    weight = std * jax.random.normal(k_w, (n, Cout, Cin, k, k), dtype=jnp.float32)
    x = jax.random.normal(k_x, (B, Cin, H, W), dtype=jnp.float32)

    # synthetic routing-function parameters
    w_alpha = 0.5 * jax.random.normal(k_a, (Cin, n), dtype=jnp.float32)
    w_theta = 0.5 * jax.random.normal(k_t, (Cin, n), dtype=jnp.float32)

    out, (alphas, angles) = adaptive_rotated_conv_forward(x, weight, w_alpha, w_theta)
    out = jax.block_until_ready(out)

    ref = reference_forward(x, weight, alphas, angles)
    assert out.shape == (B, Cout, H, W)
    # bf16 operands with f32 accumulation vs a HIGHEST-precision f32 reference:
    # tolerance sized for bf16 rounding, still catches any structural /
    # tap-ordering bug (which would produce O(1) errors).
    np.testing.assert_allclose(np.asarray(out), np.asarray(ref), rtol=3e-2, atol=3e-2)

    print("KERNEL_OK")
</pallas_src>

<mosaic_0001>
module attributes {stable_mosaic.version = 11 : i64} {
  func.func @_rotate_mm_kernel(%arg0: i32, %arg1: memref<18x36xf32, #tpu.memory_space<vmem>>, %arg2: memref<36x32xf32, #tpu.memory_space<vmem>>, %arg3: memref<18x32xbf16, #tpu.memory_space<vmem>>) attributes {dimension_semantics = [#tpu.dimension_semantics<parallel>], iteration_bounds = array<i64: 1>, scalar_prefetch = 0 : i64, scratch_operands = 0 : i64, tpu.core_type = #tpu.core_type<tc>, window_params = [{pipeline_mode = #tpu.pipeline_mode<synchronous>, transform_indices = @transform_0, window_bounds = array<i64: 18, 36>}, {transform_indices = @transform_1, window_bounds = array<i64: 36, 32>}, {transform_indices = @transform_2, window_bounds = array<i64: 18, 32>}]} {
    %c0 = arith.constant 0 : index
    %c0_0 = arith.constant 0 : index
    %0 = vector.load %arg1[%c0, %c0_0] : memref<18x36xf32, #tpu.memory_space<vmem>>, vector<18x36xf32>
    %c0_1 = arith.constant 0 : index
    %c0_2 = arith.constant 0 : index
    %1 = vector.load %arg2[%c0_1, %c0_2] : memref<36x32xf32, #tpu.memory_space<vmem>>, vector<36x32xf32>
    %cst = arith.constant dense<0.000000e+00> : vector<18x32xf32>
    %2 = tpu.matmul %0, %1, %cst {dimension_numbers = #tpu.dot_dimension_numbers<[1], [0], [0], [1], [0, 0, 1, 1], [], []>} : vector<18x36xf32>, vector<36x32xf32>, vector<18x32xf32> -> vector<18x32xf32>
    %3 = arith.truncf %2 : vector<18x32xf32> to vector<18x32xbf16>
    %c0_3 = arith.constant 0 : index
    %c0_4 = arith.constant 0 : index
    %4 = vector.load %arg3[%c0_3, %c0_4] : memref<18x32xbf16, #tpu.memory_space<vmem>>, vector<18x32xbf16>
    tpu.vector_store %arg3[%c0_3, %c0_4], %3 {strides = array<i32>} : memref<18x32xbf16, #tpu.memory_space<vmem>>, vector<18x32xbf16>,
    return
  }
  func.func @transform_0(%arg0: i32) -> (i32, i32) {
    %c0_i32 = arith.constant 0 : i32
    %c0_i32_0 = arith.constant 0 : i32
    %c0_i32_1 = arith.constant 0 : i32
    return %c0_i32, %c0_i32_0 : i32, i32
  }
  func.func @transform_1(%arg0: i32) -> (i32, i32) {
    %c0_i32 = arith.constant 0 : i32
    %c0_i32_0 = arith.constant 0 : i32
    return %c0_i32, %arg0 : i32, i32
  }
  func.func @transform_2(%arg0: i32) -> (i32, i32) {
    %c0_i32 = arith.constant 0 : i32
    %c0_i32_0 = arith.constant 0 : i32
    return %c0_i32, %arg0 : i32, i32
  }
}

</mosaic_0001>

<llo_original>
// kernel: tpu_custom_call.1
$region0: #{tpu_custom_call.1}
  #allocation0 [shape = 'u32[]', space=smem, size = 0x4, offset = 0x4, fixed_abs, tag = 'smem constant byte address 0x4 - core index']
  #allocation1 [shape = 'u32[144,128]{1,0:T(1,128)}', space=vmem, size = 0x12000, scoped, tag = 'internal scratch']
  %s0 = inlined_call_operand.vmem [shape: f32[18,36], index: 0, kind: input, shape index: {}]
  %s1 = inlined_call_operand.vmem [shape: f32[36,32], index: 1, kind: input, shape index: {}]
  %s2 = inlined_call_operand.hbm [shape: bf16[18,32], index: 2, kind: output, shape index: {}]
  %s3 = sld [smem:[#allocation0]]
  $region18: #{tpu_custom_call.1} parent=0
    _
  %s5 = ssub.s32 1, %s3
  %s6 = scalar_select 0, %s5, %s3
  $region1: #{tpu_custom_call.1} parent=0
    #allocation2 [shape = 'u8[6144]{0}', space=vmem, size = 0x1800, scoped, tag = 'output window, operand 0, single buffered']
    #allocation3 [shape = 's32[1]{0}', space=sflag, size = 0x4, scoped, tag = 'scoped memory for tpu_custom_call.1']
    %7 = vsyncpa [#allocation3], 0
    // Predicated region
    $region2: #{tpu_custom_call.1} parent=1 // pred_check
      _
    $region3: #{tpu_custom_call.1} parent=1 // pred_check_branch
      %9 = sbr.rel (0) target = $region5
    $region4: #{tpu_custom_call.1} parent=1 // pred_region
      _
    $region5: #{tpu_custom_call.1} parent=1 // pred_fallthru
      _
    // Predicated region
    $region6: #{tpu_custom_call.1} parent=1 // pred_check
      _
    $region7: #{tpu_custom_call.1} parent=1 // pred_check_branch
      %11 = sbr.rel (0) target = $region9
    $region8: #{tpu_custom_call.1} parent=1 // pred_region
      _
    $region9: #{tpu_custom_call.1} parent=1 // pred_fallthru
      _
    %v12 = vld [vmem:[%s0] sm:$0xff]
    %v13 = vld [vmem:[%s0 + $0x8] sm:$0xff]
    %v14 = vld [vmem:[%s0 + $0x10] sm:$0x3]
    %v15 = vld [vmem:[%s1] sm:$0xff]
    %v16 = vld [vmem:[%s1 + $0x8] sm:$0xff]
    %v17 = vld [vmem:[%s1 + $0x10] sm:$0xff]
    %v18 = vld [vmem:[%s1 + $0x18] sm:$0xff]
    %v19 = vld [vmem:[%s1 + $0x20] sm:$0xf]
    %vm20 = vcmask 293888
    %v22 = vsel %vm20, %v12, 0
    %v25 = vsel %vm20, %v13, 0
    %v28 = vsel %vm20, %v14, 0
    %vm30 = vcmask 1043456
    %v32 = vsel %vm30, %v19, 0
    %34 = vmatprep.subr.mxu0 0.0
    %35 = vmatpush1.msra.mxu0 0.0
    %36 = vmatprep.subr.mxu0 0.0
    %37 = vmatpush1.msra.mxu0 0.0
    %38 = vmatprep.subr.mxu0 0.0
    %39 = vmatpush1.msra.mxu0 0.0
    %40 = vmatprep.subr.mxu0 0.0
    %41 = vmatpush1.msra.mxu0 0.0
    %42 = vmatprep.subr.mxu0 0.0
    %43 = vmatpush1.msra.mxu0 0.0
    %44 = vmatprep.subr.mxu0 0.0
    %45 = vmatpush1.msra.mxu0 0.0
    %46 = vmatprep.subr.mxu0 0.0
    %47 = vmatpush1.msra.mxu0 0.0
    %48 = vmatprep.subr.mxu0 0.0
    %49 = vmatpush1.msra.mxu0 0.0
    %50 = vmatprep.subr.mxu0 0.0
    %51 = vmatpush1.msra.mxu0 0.0
    %52 = vmatprep.subr.mxu0 0.0
    %53 = vmatpush1.msra.mxu0 0.0
    %54 = vmatprep.subr.mxu0 0.0
    %55 = vmatpush1.msra.mxu0 0.0
    %56 = vmatprep.subr.mxu0 0.0
    %57 = vmatpush1.msra.mxu0 %v32
    %58 = vmatprep.subr.mxu0 0.0
    %59 = vmatpush1.msra.mxu0 %v18
    %60 = vmatprep.subr.mxu0 0.0
    %61 = vmatpush1.msra.mxu0 %v17
    %62 = vmatprep.subr.mxu0 0.0
    %63 = vmatpush1.msra.mxu0 %v16
    %64 = vmatprep.subr.mxu0 0.0
    %65 = vmatpush1.msra.mxu0 %v15
    %66 = vmatprep.subr.mxu0 0.0
    %67 = vmatpush2.msra.mxu0 0.0
    %68 = vmatprep.subr.mxu0 0.0
    %69 = vmatpush2.msra.mxu0 0.0
    %70 = vmatprep.subr.mxu0 0.0
    %71 = vmatpush2.msra.mxu0 0.0
    %72 = vmatprep.subr.mxu0 0.0
    %73 = vmatpush2.msra.mxu0 0.0
    %74 = vmatprep.subr.mxu0 0.0
    %75 = vmatpush2.msra.mxu0 0.0
    %76 = vmatprep.subr.mxu0 0.0
    %77 = vmatpush2.msra.mxu0 0.0
    %78 = vmatprep.subr.mxu0 0.0
    %79 = vmatpush2.msra.mxu0 0.0
    %80 = vmatprep.subr.mxu0 0.0
    %81 = vmatpush2.msra.mxu0 0.0
    %82 = vmatprep.subr.mxu0 0.0
    %83 = vmatpush2.msra.mxu0 0.0
    %84 = vmatprep.subr.mxu0 0.0
    %85 = vmatpush2.msra.mxu0 0.0
    %86 = vmatprep.subr.mxu0 0.0
    %87 = vmatpush2.msra.mxu0 0.0
    %88 = vmatprep.subr.mxu0 0.0
    %89 = vmatpush2.msra.mxu0 0.0
    %90 = vmatprep.subr.mxu0 0.0
    %91 = vmatpush2.msra.mxu0 0.0
    %92 = vmatprep.subr.mxu0 0.0
    %93 = vmatpush2.msra.mxu0 0.0
    %94 = vmatprep.subr.mxu0 0.0
    %95 = vmatpush2.msra.mxu0 0.0
    %96 = vmatprep.subr.mxu0 0.0
    %97 = vmatpush2.msra.mxu0 0.0
    %98 = vmatprep.mubr.f32.mxu0 0.0
    %99 = vmatmul.mubr.f32.gmra.mxu0 %v22
    %v100 = vpop.f32.mrf.mxu0
    %v101 = vadd.f32 0.0, %v100
    %v102 = vpop.f32.mrf.mxu0
    %103 = vmatprep.mubr.f32.mxu0 0.0
    %104 = vmatmul.mubr.f32.gmra.mxu0 %v25
    %v105 = vpop.f32.mrf.mxu0
    %v106 = vadd.f32 0.0, %v105
    %v107 = vpop.f32.mrf.mxu0
    %108 = vmatprep.mubr.f32.mxu0 0.0
    %109 = vmatmul.mubr.f32.gmra.mxu0 %v28
    %v110 = vpop.f32.mrf.mxu0
    %v111 = vadd.f32 0.0, %v110
    %v112 = vpop.f32.mrf.mxu0
    %113 = vdwg.mxu0
    %v114 = vpack.c.bf16 %v106, %v101
    %v115 = vpack.c.bf16 %v111, %v111
    %v118 = vunpack.c.l.b16 %v114
    %v119 = vunpack.c.h.b16 %v114
    %v120 = vunpack.c.l.b16 %v115
    %v121 = vpack.c.b16 %v118, %v118
    %v122 = vpack.c.b16 %v119, %v119
    %v123 = vpack.c.b16 %v120, %v120
    %vm127 = vcmask 257024
    %128 = vst.msk [vmem:[#allocation2] sm:$0xf] %vm127, %v121
    %129 = vst.msk [vmem:[#allocation2 + $0x4] sm:$0xf] %vm127, %v122
    %vm130 = vcmask 253952
    %131 = vst.msk [vmem:[#allocation2 + $0x8] sm:$0x1] %vm130, %v123
    // Predicated region
    $region10: #{tpu_custom_call.1} parent=1 // pred_check
      _
    $region11: #{tpu_custom_call.1} parent=1 // pred_check_branch
      %133 = sbr.rel (0) target = $region13
    $region12: #{tpu_custom_call.1} parent=1 // pred_region
      %s135 = ssub.s32 192, 192
      %136 = vsyncadd [#allocation3], %s135
      %s137 = sshll.u32 [#allocation2], 4
      %s138 = int_to_ptr.vmem [resolvable:$true] %s137
      %143 = dma.vmem_to_hbm [thread:$0]  %s138, 192, %s2, [#allocation3], 64, 64, 4
    $region13: #{tpu_custom_call.1} parent=1 // pred_fallthru
      _
    // Predicated region
    $region14: #{tpu_custom_call.1} parent=1 // pred_check
      _
    $region15: #{tpu_custom_call.1} parent=1 // pred_check_branch
      %145 = sbr.rel (0) target = $region17
    $region16: #{tpu_custom_call.1} parent=1 // pred_region
      %146 = dma.done [#allocation3], 192
    $region17: #{tpu_custom_call.1} parent=1 // pred_fallthru
      _
    %147 = vsyncpa [#allocation3], 1

</llo_original>
